<compile_context>
chip_gen: v6e
topology: v6e:2x2x1
jax: 0.10.0
libtpu: 0.0.40
codegen_flags: <defaults>
</compile_context>

<pallas_src>
import functools

import jax
import jax.numpy as jnp
from jax.experimental import pallas as pl
from jax.experimental.pallas import tpu as pltpu

_LANE = 128


def _round_up(x, m):
    return ((x + m - 1) // m) * m


def _decoder_kernel(n_layers, h_pad, o_pad, *refs):
    """Single-step multi-layer LSTM + output Linear, fully resident in VMEM.

    Inputs (in order):
      x_ref      : (B, O_pad)                 f32
      h_in_ref   : (L, B, H_pad)              f32   (aliased with h_out_ref)
      c_in_ref   : (L, B, H_pad)              f32   (aliased with c_out_ref)
      per layer: w_ref (O_pad+H_pad, 4*H_pad) bf16  packed [w_ih ; w_hh]
                 b_ref (1, 4*H_pad)           f32   (= b_ih + b_hh)
      w_fc_ref   : (H_pad, O_pad)             bf16
      b_fc_ref   : (1, O_pad)                 f32
    Outputs:
      pred_ref   : (B, O_pad)                 f32
      h_out_ref  : (L, B, H_pad)              f32
      c_out_ref  : (L, B, H_pad)              f32
    Scratch:
      xh_ref     : (B, O_pad + H_pad)         bf16  packed [layer input ; h_prev]
    """
    n_in = 3 + 2 * n_layers + 2
    in_refs = refs[:n_in]
    pred_ref, h_out_ref, c_out_ref, xh_ref = refs[n_in:]

    x_ref, h_in_ref, c_in_ref = in_refs[:3]
    layer_refs = in_refs[3:3 + 2 * n_layers]
    w_fc_ref, b_fc_ref = in_refs[3 + 2 * n_layers:]

    H = h_pad

    # Layer-0 input occupies the low O_pad lanes of the packed activation.
    xh_ref[:, :o_pad] = x_ref[...].astype(jnp.bfloat16)

    last_h = None
    for l in range(n_layers):                       # static unroll
        w_ref = layer_refs[2 * l + 0]               # (O_pad + H_pad, 4H) bf16
        b_ref = layer_refs[2 * l + 1]               # (1, 4H) f32

        h_prev = h_in_ref[l]                        # (B, H) f32
        c_prev = c_in_ref[l]                        # (B, H) f32
        xh_ref[:, o_pad:] = h_prev.astype(jnp.bfloat16)

        # Single MXU contraction per layer: (B, O_pad+H) @ (O_pad+H, 4H).
        gates = jnp.dot(xh_ref[...], w_ref[...],
                        preferred_element_type=jnp.float32) + b_ref[...]

        # PyTorch gate order i, f, g, o. H is a multiple of 128, so these are
        # lane-tile-aligned slices (no cross-lane shuffles).
        i_g = jax.nn.sigmoid(gates[:, 0 * H:1 * H])
        f_g = jax.nn.sigmoid(gates[:, 1 * H:2 * H])
        g_g = jnp.tanh(gates[:, 2 * H:3 * H])
        o_g = jax.nn.sigmoid(gates[:, 3 * H:4 * H])

        c_new = f_g * c_prev + i_g * g_g
        h_new = o_g * jnp.tanh(c_new)

        h_out_ref[l] = h_new
        c_out_ref[l] = c_new

        if l + 1 < n_layers:
            # Next layer's input goes into the low H_pad lanes; weight rows
            # [hid_dim : O_pad] for layers >= 1 are zero, so any stale x lanes
            # in [H_pad : O_pad] are inert.
            xh_ref[:, :H] = h_new.astype(jnp.bfloat16)
        last_h = h_new

    # fc_out on the last layer's hidden state (== output.squeeze(0)).
    pred_ref[...] = (jnp.dot(last_h.astype(jnp.bfloat16), w_fc_ref[...],
                             preferred_element_type=jnp.float32)
                     + b_fc_ref[...])


def pack_decoder_params(layer_params, fc_params, *, hid_dim, output_size):
    """Pack PyTorch-layout LSTM/Linear params into kernel layout (done once).

    layer_params: list of (w_ih (4H,in_dim), w_hh (4H,H), b_ih (4H,), b_hh (4H,))
    fc_params:    (w_fc (output_size, H), b_fc (output_size,))
    """
    h_pad = _round_up(hid_dim, _LANE)
    o_pad = _round_up(output_size, _LANE)
    K = o_pad + h_pad

    packed_layers = []
    for (w_ih, w_hh, b_ih, b_hh) in layer_params:
        in_dim = w_ih.shape[1]
        w = jnp.zeros((K, 4 * h_pad), jnp.float32)
        b = jnp.zeros((1, 4 * h_pad), jnp.float32)
        for g in range(4):                      # gate order i, f, g, o
            rows = slice(g * hid_dim, (g + 1) * hid_dim)
            cols = slice(g * h_pad, g * h_pad + hid_dim)
            w = w.at[:in_dim, cols].set(jnp.transpose(w_ih[rows, :]))
            w = w.at[o_pad:o_pad + hid_dim, cols].set(jnp.transpose(w_hh[rows, :]))
            b = b.at[0, cols].set(b_ih[rows] + b_hh[rows])
        packed_layers.append((w.astype(jnp.bfloat16), b))

    w_fc, b_fc = fc_params
    w_fc_p = (jnp.zeros((h_pad, o_pad), jnp.float32)
              .at[:hid_dim, :output_size].set(jnp.transpose(w_fc))
              .astype(jnp.bfloat16))
    b_fc_p = jnp.zeros((1, o_pad), jnp.float32).at[0, :output_size].set(b_fc)
    return (tuple(packed_layers), (w_fc_p, b_fc_p))


@jax.jit
def decoder_forward(x, hidden, cell, packed_params):
    """Forward pass: prediction, new hidden, new cell (matches Decoder.forward)."""
    layers, (w_fc_p, b_fc_p) = packed_params
    n_layers, B, hid_dim = hidden.shape
    output_size = x.shape[-1]
    h_pad, o_pad = w_fc_p.shape

    # Lane-dense padded views (padding provably stays zero through the step).
    x_p = jnp.zeros((B, o_pad), jnp.float32).at[:, :output_size].set(x)
    h_p = jnp.zeros((n_layers, B, h_pad), jnp.float32).at[:, :, :hid_dim].set(hidden)
    c_p = jnp.zeros((n_layers, B, h_pad), jnp.float32).at[:, :, :hid_dim].set(cell)

    flat_inputs = [x_p, h_p, c_p]
    for (w, b) in layers:
        flat_inputs += [w, b]
    flat_inputs += [w_fc_p, b_fc_p]

    vmem = pl.BlockSpec(memory_space=pltpu.MemorySpace.VMEM)
    kernel = functools.partial(_decoder_kernel, n_layers, h_pad, o_pad)

    pred_p, h_new_p, c_new_p = pl.pallas_call(
        kernel,
        out_shape=(
            jax.ShapeDtypeStruct((B, o_pad), jnp.float32),
            jax.ShapeDtypeStruct((n_layers, B, h_pad), jnp.float32),
            jax.ShapeDtypeStruct((n_layers, B, h_pad), jnp.float32),
        ),
        in_specs=[vmem] * len(flat_inputs),
        out_specs=(vmem, vmem, vmem),
        scratch_shapes=[pltpu.VMEM((B, o_pad + h_pad), jnp.bfloat16)],
        input_output_aliases={1: 1, 2: 2},   # hidden/cell updated in place
    )(*flat_inputs)

    return (pred_p[:, :output_size],
            h_new_p[:, :, :hid_dim],
            c_new_p[:, :, :hid_dim])


def _reference_forward(x, hidden, cell, layer_params, fc_params):
    """Pure-JAX reference mirroring the kernel numerics (bf16 weights, f32 acc)."""
    inp = x
    h_out, c_out = [], []
    for l, (w_ih, w_hh, b_ih, b_hh) in enumerate(layer_params):
        H = w_hh.shape[1]
        gates = (jnp.dot(inp.astype(jnp.bfloat16),
                         jnp.transpose(w_ih).astype(jnp.bfloat16),
                         preferred_element_type=jnp.float32)
                 + jnp.dot(hidden[l].astype(jnp.bfloat16),
                           jnp.transpose(w_hh).astype(jnp.bfloat16),
                           preferred_element_type=jnp.float32)
                 + b_ih + b_hh)
        i_g = jax.nn.sigmoid(gates[:, 0 * H:1 * H])
        f_g = jax.nn.sigmoid(gates[:, 1 * H:2 * H])
        g_g = jnp.tanh(gates[:, 2 * H:3 * H])
        o_g = jax.nn.sigmoid(gates[:, 3 * H:4 * H])
        c_new = f_g * cell[l] + i_g * g_g
        h_new = o_g * jnp.tanh(c_new)
        h_out.append(h_new)
        c_out.append(c_new)
        inp = h_new
    w_fc, b_fc = fc_params
    pred = (jnp.dot(inp.astype(jnp.bfloat16),
                    jnp.transpose(w_fc).astype(jnp.bfloat16),
                    preferred_element_type=jnp.float32) + b_fc)
    return pred, jnp.stack(h_out), jnp.stack(c_out)


if __name__ == "__main__":
    # Small shapes consistent with the module's forward semantics.
    batch = 2
    hid_dim = 32
    n_layers = 2
    output_size = 48   # module default is 26*6 = 156; kept small here

    key = jax.random.PRNGKey(0)
    keys = list(jax.random.split(key, 3 + 4 * n_layers + 2))
    k_iter = iter(keys)

    bound = 1.0 / (hid_dim ** 0.5)

    def uni(k, shape):
        return jax.random.uniform(k, shape, jnp.float32, -bound, bound)

    # Inputs.
    x = jax.random.normal(next(k_iter), (batch, output_size), jnp.float32)
    hidden = jax.random.normal(next(k_iter), (n_layers, batch, hid_dim), jnp.float32)
    cell = jax.random.normal(next(k_iter), (n_layers, batch, hid_dim), jnp.float32)

    # LSTM + fc_out parameters in PyTorch layout.
    layer_params = []
    for l in range(n_layers):
        in_dim = output_size if l == 0 else hid_dim
        w_ih = uni(next(k_iter), (4 * hid_dim, in_dim))    # weight_ih_l{l}
        w_hh = uni(next(k_iter), (4 * hid_dim, hid_dim))   # weight_hh_l{l}
        b_ih = uni(next(k_iter), (4 * hid_dim,))
        b_hh = uni(next(k_iter), (4 * hid_dim,))
        layer_params.append((w_ih, w_hh, b_ih, b_hh))

    w_fc = uni(next(k_iter), (output_size, hid_dim))
    b_fc = uni(next(k_iter), (output_size,))
    fc_params = (w_fc, b_fc)

    # One-time packing (bf16, padded, [w_ih ; w_hh] fused).
    packed = pack_decoder_params(layer_params, fc_params,
                                 hid_dim=hid_dim, output_size=output_size)

    pred, h_new, c_new = decoder_forward(x, hidden, cell, packed)
    jax.block_until_ready((pred, h_new, c_new))

    # Validate against a pure-JAX reference with matching bf16-weight numerics.
    pred_ref, h_ref, c_ref = _reference_forward(x, hidden, cell,
                                                layer_params, fc_params)
    assert jnp.allclose(pred, pred_ref, atol=5e-3), "prediction mismatch"
    assert jnp.allclose(h_new, h_ref, atol=5e-3), "hidden mismatch"
    assert jnp.allclose(c_new, c_ref, atol=5e-3), "cell mismatch"

    print("KERNEL_OK")
</pallas_src>

<mosaic_0001>
module attributes {stable_mosaic.version = 11 : i64} {
  func.func @_decoder_kernel(%arg0: memref<2x128xf32, #tpu.memory_space<vmem>>, %arg1: memref<2x2x128xf32, #tpu.memory_space<vmem>>, %arg2: memref<2x2x128xf32, #tpu.memory_space<vmem>>, %arg3: memref<256x512xbf16, #tpu.memory_space<vmem>>, %arg4: memref<1x512xf32, #tpu.memory_space<vmem>>, %arg5: memref<256x512xbf16, #tpu.memory_space<vmem>>, %arg6: memref<1x512xf32, #tpu.memory_space<vmem>>, %arg7: memref<128x128xbf16, #tpu.memory_space<vmem>>, %arg8: memref<1x128xf32, #tpu.memory_space<vmem>>, %arg9: memref<2x128xf32, #tpu.memory_space<vmem>>, %arg10: memref<2x2x128xf32, #tpu.memory_space<vmem>>, %arg11: memref<2x2x128xf32, #tpu.memory_space<vmem>>, %arg12: memref<2x256xbf16, #tpu.memory_space<vmem>>) attributes {dimension_semantics = [], scalar_prefetch = 0 : i64, scratch_operands = 1 : i64, tpu.core_type = #tpu.core_type<tc>} {
    %c0 = arith.constant 0 : index
    %c0_0 = arith.constant 0 : index
    %0 = vector.load %arg0[%c0, %c0_0] : memref<2x128xf32, #tpu.memory_space<vmem>>, vector<2x128xf32>
    %1 = arith.truncf %0 : vector<2x128xf32> to vector<2x128xbf16>
    %c0_1 = arith.constant 0 : index
    %c0_2 = arith.constant 0 : index
    %2 = vector.load %arg12[%c0_1, %c0_2] : memref<2x256xbf16, #tpu.memory_space<vmem>>, vector<2x128xbf16>
    tpu.vector_store %arg12[%c0_1, %c0_2], %1 {strides = array<i32>} : memref<2x256xbf16, #tpu.memory_space<vmem>>, vector<2x128xbf16>,
    %c0_3 = arith.constant 0 : index
    %c0_4 = arith.constant 0 : index
    %c0_5 = arith.constant 0 : index
    %3 = vector.load %arg1[%c0_3, %c0_4, %c0_5] : memref<2x2x128xf32, #tpu.memory_space<vmem>>, vector<1x2x128xf32>
    %4 = vector.shape_cast %3 : vector<1x2x128xf32> to vector<2x128xf32>
    %c0_6 = arith.constant 0 : index
    %c0_7 = arith.constant 0 : index
    %c0_8 = arith.constant 0 : index
    %5 = vector.load %arg2[%c0_6, %c0_7, %c0_8] : memref<2x2x128xf32, #tpu.memory_space<vmem>>, vector<1x2x128xf32>
    %6 = vector.shape_cast %5 : vector<1x2x128xf32> to vector<2x128xf32>
    %7 = arith.truncf %4 : vector<2x128xf32> to vector<2x128xbf16>
    %c0_9 = arith.constant 0 : index
    %c128 = arith.constant 128 : index
    %8 = vector.load %arg12[%c0_9, %c128] : memref<2x256xbf16, #tpu.memory_space<vmem>>, vector<2x128xbf16>
    tpu.vector_store %arg12[%c0_9, %c128], %7 {strides = array<i32>} : memref<2x256xbf16, #tpu.memory_space<vmem>>, vector<2x128xbf16>,
    %c0_10 = arith.constant 0 : index
    %c0_11 = arith.constant 0 : index
    %9 = vector.load %arg12[%c0_10, %c0_11] : memref<2x256xbf16, #tpu.memory_space<vmem>>, vector<2x256xbf16>
    %c0_12 = arith.constant 0 : index
    %c0_13 = arith.constant 0 : index
    %10 = vector.load %arg3[%c0_12, %c0_13] : memref<256x512xbf16, #tpu.memory_space<vmem>>, vector<256x512xbf16>
    %cst = arith.constant dense<0.000000e+00> : vector<2x512xf32>
    %11 = tpu.matmul %9, %10, %cst {dimension_numbers = #tpu.dot_dimension_numbers<[1], [0], [0], [1], [0, 0, 1, 1], [], []>} : vector<2x256xbf16>, vector<256x512xbf16>, vector<2x512xf32> -> vector<2x512xf32>
    %c0_14 = arith.constant 0 : index
    %c0_15 = arith.constant 0 : index
    %12 = vector.load %arg4[%c0_14, %c0_15] : memref<1x512xf32, #tpu.memory_space<vmem>>, vector<1x512xf32>
    %13 = vector.broadcast %12 : vector<1x512xf32> to vector<2x512xf32>
    %14 = arith.addf %11, %13 : vector<2x512xf32>
    %15 = vector.extract_strided_slice %14 {offsets = [0, 0], sizes = [2, 128], strides = [1, 1]} : vector<2x512xf32> to vector<2x128xf32>
    %16 = arith.negf %15 : vector<2x128xf32>
    %17 = math.exp %16 : vector<2x128xf32>
    %cst_16 = arith.constant 1.000000e+00 : f32
    %18 = vector.broadcast %cst_16 : f32 to vector<2x128xf32>
    %19 = arith.addf %18, %17 : vector<2x128xf32>
    %20 = arith.divf %18, %19 : vector<2x128xf32>
    %21 = vector.extract_strided_slice %14 {offsets = [0, 128], sizes = [2, 128], strides = [1, 1]} : vector<2x512xf32> to vector<2x128xf32>
    %22 = arith.negf %21 : vector<2x128xf32>
    %23 = math.exp %22 : vector<2x128xf32>
    %cst_17 = arith.constant 1.000000e+00 : f32
    %24 = vector.broadcast %cst_17 : f32 to vector<2x128xf32>
    %25 = arith.addf %24, %23 : vector<2x128xf32>
    %26 = arith.divf %24, %25 : vector<2x128xf32>
    %27 = vector.extract_strided_slice %14 {offsets = [0, 256], sizes = [2, 128], strides = [1, 1]} : vector<2x512xf32> to vector<2x128xf32>
    %28 = math.tanh %27 : vector<2x128xf32>
    %29 = vector.extract_strided_slice %14 {offsets = [0, 384], sizes = [2, 128], strides = [1, 1]} : vector<2x512xf32> to vector<2x128xf32>
    %30 = arith.negf %29 : vector<2x128xf32>
    %31 = math.exp %30 : vector<2x128xf32>
    %cst_18 = arith.constant 1.000000e+00 : f32
    %32 = vector.broadcast %cst_18 : f32 to vector<2x128xf32>
    %33 = arith.addf %32, %31 : vector<2x128xf32>
    %34 = arith.divf %32, %33 : vector<2x128xf32>
    %35 = arith.mulf %26, %6 : vector<2x128xf32>
    %36 = arith.mulf %20, %28 : vector<2x128xf32>
    %37 = arith.addf %35, %36 : vector<2x128xf32>
    %38 = math.tanh %37 : vector<2x128xf32>
    %39 = arith.mulf %34, %38 : vector<2x128xf32>
    %c0_19 = arith.constant 0 : index
    %c0_20 = arith.constant 0 : index
    %c0_21 = arith.constant 0 : index
    %40 = vector.load %arg10[%c0_19, %c0_20, %c0_21] : memref<2x2x128xf32, #tpu.memory_space<vmem>>, vector<1x2x128xf32>
    %41 = vector.shape_cast %40 : vector<1x2x128xf32> to vector<2x128xf32>
    %42 = vector.shape_cast %39 : vector<2x128xf32> to vector<1x2x128xf32>
    tpu.vector_store %arg10[%c0_19, %c0_20, %c0_21], %42 {strides = array<i32>} : memref<2x2x128xf32, #tpu.memory_space<vmem>>, vector<1x2x128xf32>,
    %c0_22 = arith.constant 0 : index
    %c0_23 = arith.constant 0 : index
    %c0_24 = arith.constant 0 : index
    %43 = vector.load %arg11[%c0_22, %c0_23, %c0_24] : memref<2x2x128xf32, #tpu.memory_space<vmem>>, vector<1x2x128xf32>
    %44 = vector.shape_cast %43 : vector<1x2x128xf32> to vector<2x128xf32>
    %45 = vector.shape_cast %37 : vector<2x128xf32> to vector<1x2x128xf32>
    tpu.vector_store %arg11[%c0_22, %c0_23, %c0_24], %45 {strides = array<i32>} : memref<2x2x128xf32, #tpu.memory_space<vmem>>, vector<1x2x128xf32>,
    %46 = arith.truncf %39 : vector<2x128xf32> to vector<2x128xbf16>
    %c0_25 = arith.constant 0 : index
    %c0_26 = arith.constant 0 : index
    %47 = vector.load %arg12[%c0_25, %c0_26] : memref<2x256xbf16, #tpu.memory_space<vmem>>, vector<2x128xbf16>
    tpu.vector_store %arg12[%c0_25, %c0_26], %46 {strides = array<i32>} : memref<2x256xbf16, #tpu.memory_space<vmem>>, vector<2x128xbf16>,
    %c1 = arith.constant 1 : index
    %c0_27 = arith.constant 0 : index
    %c0_28 = arith.constant 0 : index
    %48 = vector.load %arg1[%c1, %c0_27, %c0_28] : memref<2x2x128xf32, #tpu.memory_space<vmem>>, vector<1x2x128xf32>
    %49 = vector.shape_cast %48 : vector<1x2x128xf32> to vector<2x128xf32>
    %c1_29 = arith.constant 1 : index
    %c0_30 = arith.constant 0 : index
    %c0_31 = arith.constant 0 : index
    %50 = vector.load %arg2[%c1_29, %c0_30, %c0_31] : memref<2x2x128xf32, #tpu.memory_space<vmem>>, vector<1x2x128xf32>
    %51 = vector.shape_cast %50 : vector<1x2x128xf32> to vector<2x128xf32>
    %52 = arith.truncf %49 : vector<2x128xf32> to vector<2x128xbf16>
    %c0_32 = arith.constant 0 : index
    %c128_33 = arith.constant 128 : index
    %53 = vector.load %arg12[%c0_32, %c128_33] : memref<2x256xbf16, #tpu.memory_space<vmem>>, vector<2x128xbf16>
    tpu.vector_store %arg12[%c0_32, %c128_33], %52 {strides = array<i32>} : memref<2x256xbf16, #tpu.memory_space<vmem>>, vector<2x128xbf16>,
    %c0_34 = arith.constant 0 : index
    %c0_35 = arith.constant 0 : index
    %54 = vector.load %arg12[%c0_34, %c0_35] : memref<2x256xbf16, #tpu.memory_space<vmem>>, vector<2x256xbf16>
    %c0_36 = arith.constant 0 : index
    %c0_37 = arith.constant 0 : index
    %55 = vector.load %arg5[%c0_36, %c0_37] : memref<256x512xbf16, #tpu.memory_space<vmem>>, vector<256x512xbf16>
    %cst_38 = arith.constant dense<0.000000e+00> : vector<2x512xf32>
    %56 = tpu.matmul %54, %55, %cst_38 {dimension_numbers = #tpu.dot_dimension_numbers<[1], [0], [0], [1], [0, 0, 1, 1], [], []>} : vector<2x256xbf16>, vector<256x512xbf16>, vector<2x512xf32> -> vector<2x512xf32>
    %c0_39 = arith.constant 0 : index
    %c0_40 = arith.constant 0 : index
    %57 = vector.load %arg6[%c0_39, %c0_40] : memref<1x512xf32, #tpu.memory_space<vmem>>, vector<1x512xf32>
    %58 = vector.broadcast %57 : vector<1x512xf32> to vector<2x512xf32>
    %59 = arith.addf %56, %58 : vector<2x512xf32>
    %60 = vector.extract_strided_slice %59 {offsets = [0, 0], sizes = [2, 128], strides = [1, 1]} : vector<2x512xf32> to vector<2x128xf32>
    %61 = arith.negf %60 : vector<2x128xf32>
    %62 = math.exp %61 : vector<2x128xf32>
    %cst_41 = arith.constant 1.000000e+00 : f32
    %63 = vector.broadcast %cst_41 : f32 to vector<2x128xf32>
    %64 = arith.addf %63, %62 : vector<2x128xf32>
    %65 = arith.divf %63, %64 : vector<2x128xf32>
    %66 = vector.extract_strided_slice %59 {offsets = [0, 128], sizes = [2, 128], strides = [1, 1]} : vector<2x512xf32> to vector<2x128xf32>
    %67 = arith.negf %66 : vector<2x128xf32>
    %68 = math.exp %67 : vector<2x128xf32>
    %cst_42 = arith.constant 1.000000e+00 : f32
    %69 = vector.broadcast %cst_42 : f32 to vector<2x128xf32>
    %70 = arith.addf %69, %68 : vector<2x128xf32>
    %71 = arith.divf %69, %70 : vector<2x128xf32>
    %72 = vector.extract_strided_slice %59 {offsets = [0, 256], sizes = [2, 128], strides = [1, 1]} : vector<2x512xf32> to vector<2x128xf32>
    %73 = math.tanh %72 : vector<2x128xf32>
    %74 = vector.extract_strided_slice %59 {offsets = [0, 384], sizes = [2, 128], strides = [1, 1]} : vector<2x512xf32> to vector<2x128xf32>
    %75 = arith.negf %74 : vector<2x128xf32>
    %76 = math.exp %75 : vector<2x128xf32>
    %cst_43 = arith.constant 1.000000e+00 : f32
    %77 = vector.broadcast %cst_43 : f32 to vector<2x128xf32>
    %78 = arith.addf %77, %76 : vector<2x128xf32>
    %79 = arith.divf %77, %78 : vector<2x128xf32>
    %80 = arith.mulf %71, %51 : vector<2x128xf32>
    %81 = arith.mulf %65, %73 : vector<2x128xf32>
    %82 = arith.addf %80, %81 : vector<2x128xf32>
    %83 = math.tanh %82 : vector<2x128xf32>
    %84 = arith.mulf %79, %83 : vector<2x128xf32>
    %c1_44 = arith.constant 1 : index
    %c0_45 = arith.constant 0 : index
    %c0_46 = arith.constant 0 : index
    %85 = vector.load %arg10[%c1_44, %c0_45, %c0_46] : memref<2x2x128xf32, #tpu.memory_space<vmem>>, vector<1x2x128xf32>
    %86 = vector.shape_cast %85 : vector<1x2x128xf32> to vector<2x128xf32>
    %87 = vector.shape_cast %84 : vector<2x128xf32> to vector<1x2x128xf32>
    tpu.vector_store %arg10[%c1_44, %c0_45, %c0_46], %87 {strides = array<i32>} : memref<2x2x128xf32, #tpu.memory_space<vmem>>, vector<1x2x128xf32>,
    %c1_47 = arith.constant 1 : index
    %c0_48 = arith.constant 0 : index
    %c0_49 = arith.constant 0 : index
    %88 = vector.load %arg11[%c1_47, %c0_48, %c0_49] : memref<2x2x128xf32, #tpu.memory_space<vmem>>, vector<1x2x128xf32>
    %89 = vector.shape_cast %88 : vector<1x2x128xf32> to vector<2x128xf32>
    %90 = vector.shape_cast %82 : vector<2x128xf32> to vector<1x2x128xf32>
    tpu.vector_store %arg11[%c1_47, %c0_48, %c0_49], %90 {strides = array<i32>} : memref<2x2x128xf32, #tpu.memory_space<vmem>>, vector<1x2x128xf32>,
    %91 = arith.truncf %84 : vector<2x128xf32> to vector<2x128xbf16>
    %c0_50 = arith.constant 0 : index
    %c0_51 = arith.constant 0 : index
    %92 = vector.load %arg7[%c0_50, %c0_51] : memref<128x128xbf16, #tpu.memory_space<vmem>>, vector<128x128xbf16>
    %cst_52 = arith.constant dense<0.000000e+00> : vector<2x128xf32>
    %93 = tpu.matmul %91, %92, %cst_52 {dimension_numbers = #tpu.dot_dimension_numbers<[1], [0], [0], [1], [0, 0, 1, 1], [], []>} : vector<2x128xbf16>, vector<128x128xbf16>, vector<2x128xf32> -> vector<2x128xf32>
    %c0_53 = arith.constant 0 : index
    %c0_54 = arith.constant 0 : index
    %94 = vector.load %arg8[%c0_53, %c0_54] : memref<1x128xf32, #tpu.memory_space<vmem>>, vector<1x128xf32>
    %95 = vector.broadcast %94 : vector<1x128xf32> to vector<2x128xf32>
    %96 = arith.addf %93, %95 : vector<2x128xf32>
    %c0_55 = arith.constant 0 : index
    %c0_56 = arith.constant 0 : index
    %97 = vector.load %arg9[%c0_55, %c0_56] : memref<2x128xf32, #tpu.memory_space<vmem>>, vector<2x128xf32>
    tpu.vector_store %arg9[%c0_55, %c0_56], %96 {strides = array<i32>} : memref<2x128xf32, #tpu.memory_space<vmem>>, vector<2x128xf32>,
    return
  }
}

</mosaic_0001>

<llo_original>
// kernel: decoder_forward.1
$region0: #{decoder_forward.1}
  #allocation0 [shape = 'u32[]', space=smem, size = 0x4, offset = 0x4, fixed_abs, tag = 'smem constant byte address 0x4 - core index']
  #allocation1 [shape = 'u32[144,128]{1,0:T(1,128)}', space=vmem, size = 0x12000, scoped, tag = 'internal scratch']
  #allocation2 [shape = 'bf16[2,256]{1,0:T(2,128)(2,1)}', space=vmem, size = 0x400, scoped, tag = 'scratch operand']
  %s0 = inlined_call_operand.vmem [shape: f32[2,128], index: 0, kind: input, shape index: {}]
  %s1 = inlined_call_operand.vmem [shape: f32[2,2,128], index: 1, kind: input, shape index: {}, may-alias: {1,10}]
  %s2 = inlined_call_operand.vmem [shape: f32[2,2,128], index: 2, kind: input, shape index: {}, may-alias: {2,11}]
  %s3 = inlined_call_operand.hbm [shape: bf16[256,512], index: 3, kind: input, shape index: {}]
  %s4 = inlined_call_operand.vmem [shape: f32[1,512], index: 4, kind: input, shape index: {}]
  %s5 = inlined_call_operand.hbm [shape: bf16[256,512], index: 5, kind: input, shape index: {}]
  %s6 = inlined_call_operand.vmem [shape: f32[1,512], index: 6, kind: input, shape index: {}]
  %s7 = inlined_call_operand.hbm [shape: bf16[128,128], index: 7, kind: input, shape index: {}]
  %s8 = inlined_call_operand.vmem [shape: f32[1,128], index: 8, kind: input, shape index: {}]
  %s9 = inlined_call_operand.hbm [shape: f32[2,128], index: 9, kind: output, shape index: {0}]
  %s10 = inlined_call_operand.vmem [shape: f32[2,2,128], index: 10, kind: output, shape index: {1}, may-alias: {1,10}]
  %s11 = inlined_call_operand.vmem [shape: f32[2,2,128], index: 11, kind: output, shape index: {2}, may-alias: {2,11}]
  %12 = xla_tuple %s9, %s10, %s11
  %s13 = sld [smem:[#allocation0]]
  $region74: #{decoder_forward.1} parent=0
    _
  %s15 = ssub.s32 1, %s13
  %s16 = scalar_select 0, %s15, %s13
  $region1: #{decoder_forward.1} parent=0
    #allocation3 [shape = 'u8[262144]{0}', space=vmem, size = 0x40000, scoped, tag = 'input window, operand 3, single buffered']
    #allocation4 [shape = 's32[1]{0}', space=sflag, size = 0x4, scoped, tag = 'scoped memory for decoder_forward.1']
    #allocation5 [shape = 's32[1]{0}', space=sflag, size = 0x4, scoped, tag = 'scoped memory for decoder_forward.1']
    #allocation6 [shape = 'u8[262144]{0}', space=vmem, size = 0x40000, scoped, tag = 'input window, operand 5, single buffered']
    #allocation7 [shape = 's32[1]{0}', space=sflag, size = 0x4, scoped, tag = 'scoped memory for decoder_forward.1']
    #allocation8 [shape = 'u8[32768]{0}', space=vmem, size = 0x8000, scoped, tag = 'input window, operand 7, single buffered']
    #allocation9 [shape = 'u8[1024]{0}', space=vmem, size = 0x400, scoped, tag = 'output window, operand 0, single buffered']
    %17 = vsyncpa [#allocation4], 0
    %18 = vsyncpa [#allocation7], 0
    %19 = vsyncpa [#allocation5], 0
    // Predicated region
    $region2: #{decoder_forward.1} parent=1 // pred_check
      _
    $region3: #{decoder_forward.1} parent=1 // pred_check_branch
      %21 = sbr.rel (0) target = $region5
    $region4: #{decoder_forward.1} parent=1 // pred_region
      _
    $region5: #{decoder_forward.1} parent=1 // pred_fallthru
      _
    // Predicated region
    $region6: #{decoder_forward.1} parent=1 // pred_check
      _
    $region7: #{decoder_forward.1} parent=1 // pred_check_branch
      %23 = sbr.rel (0) target = $region9
    $region8: #{decoder_forward.1} parent=1 // pred_region
      _
    $region9: #{decoder_forward.1} parent=1 // pred_fallthru
      _
    // Predicated region
    $region10: #{decoder_forward.1} parent=1 // pred_check
      _
    $region11: #{decoder_forward.1} parent=1 // pred_check_branch
      %25 = sbr.rel (0) target = $region13
    $region12: #{decoder_forward.1} parent=1 // pred_region
      _
    $region13: #{decoder_forward.1} parent=1 // pred_fallthru
      _
    // Predicated region
    $region14: #{decoder_forward.1} parent=1 // pred_check
      _
    $region15: #{decoder_forward.1} parent=1 // pred_check_branch
      %27 = sbr.rel (0) target = $region17
    $region16: #{decoder_forward.1} parent=1 // pred_region
      %s29 = ssub.s32 8192, 8192
      %30 = vsyncadd [#allocation4], %s29
      %s31 = sshll.u32 [#allocation3], 4
      %s32 = int_to_ptr.vmem [resolvable:$true] %s31
      %37 = dma.hbm_to_vmem [thread:$0]  %s3, 8192, %s32, [#allocation4], 256, 256, 16
    $region17: #{decoder_forward.1} parent=1 // pred_fallthru
      _
    // Predicated region
    $region18: #{decoder_forward.1} parent=1 // pred_check
      _
    $region19: #{decoder_forward.1} parent=1 // pred_check_branch
      %39 = sbr.rel (0) target = $region21
    $region20: #{decoder_forward.1} parent=1 // pred_region
      _
    $region21: #{decoder_forward.1} parent=1 // pred_fallthru
      _
    // Predicated region
    $region22: #{decoder_forward.1} parent=1 // pred_check
      _
    $region23: #{decoder_forward.1} parent=1 // pred_check_branch
      %41 = sbr.rel (0) target = $region25
    $region24: #{decoder_forward.1} parent=1 // pred_region
      %s43 = ssub.s32 8192, 8192
      %44 = vsyncadd [#allocation7], %s43
      %s45 = sshll.u32 [#allocation6], 4
      %s46 = int_to_ptr.vmem [resolvable:$true] %s45
      %51 = dma.hbm_to_vmem [thread:$0]  %s5, 8192, %s46, [#allocation7], 256, 256, 16
    $region25: #{decoder_forward.1} parent=1 // pred_fallthru
      _
    // Predicated region
    $region26: #{decoder_forward.1} parent=1 // pred_check
      _
    $region27: #{decoder_forward.1} parent=1 // pred_check_branch
      %53 = sbr.rel (0) target = $region29
    $region28: #{decoder_forward.1} parent=1 // pred_region
      _
    $region29: #{decoder_forward.1} parent=1 // pred_fallthru
      _
    // Predicated region
    $region30: #{decoder_forward.1} parent=1 // pred_check
      _
    $region31: #{decoder_forward.1} parent=1 // pred_check_branch
      %55 = sbr.rel (0) target = $region33
    $region32: #{decoder_forward.1} parent=1 // pred_region
      %s57 = ssub.s32 1024, 1024
      %58 = vsyncadd [#allocation7], %s57
      %s59 = sshll.u32 [#allocation8], 4
      %s60 = int_to_ptr.vmem [resolvable:$true] %s59
      %65 = dma.hbm_to_vmem [thread:$0]  %s7, 1024, %s60, [#allocation7], 64, 64, 4
    $region33: #{decoder_forward.1} parent=1 // pred_fallthru
      _
    // Predicated region
    $region34: #{decoder_forward.1} parent=1 // pred_check
      _
    $region35: #{decoder_forward.1} parent=1 // pred_check_branch
      %67 = sbr.rel (0) target = $region37
    $region36: #{decoder_forward.1} parent=1 // pred_region
      _
    $region37: #{decoder_forward.1} parent=1 // pred_fallthru
      _
    // Predicated region
    $region38: #{decoder_forward.1} parent=1 // pred_check
      _
    $region39: #{decoder_forward.1} parent=1 // pred_check_branch
      %69 = sbr.rel (0) target = $region41
    $region40: #{decoder_forward.1} parent=1 // pred_region
      %70 = dma.done [#allocation4], 8192
    $region41: #{decoder_forward.1} parent=1 // pred_fallthru
      _
    // Predicated region
    $region42: #{decoder_forward.1} parent=1 // pred_check
      _
    $region43: #{decoder_forward.1} parent=1 // pred_check_branch
      %72 = sbr.rel (0) target = $region45
    $region44: #{decoder_forward.1} parent=1 // pred_region
      %73 = dma.done [#allocation7], 8192
    $region45: #{decoder_forward.1} parent=1 // pred_fallthru
      _
    // Predicated region
    $region46: #{decoder_forward.1} parent=1 // pred_check
      _
    $region47: #{decoder_forward.1} parent=1 // pred_check_branch
      %75 = sbr.rel (0) target = $region49
    $region48: #{decoder_forward.1} parent=1 // pred_region
      %76 = dma.done [#allocation7], 1024
    $region49: #{decoder_forward.1} parent=1 // pred_fallthru
      _
    %v78 = vld [vmem:[%s0] sm:$0x3]
    %v79 = vpack.c.bf16 %v78, %v78
    %80 = vst [vmem:[#allocation2] sm:$0x1] %v79
    %v81 = vld [vmem:[%s1] sm:$0x3]
    %v82 = vld [vmem:[%s2] sm:$0x3]
    %v83 = vpack.c.bf16 %v81, %v81
    %84 = vst [vmem:[#allocation2 + $0x1] sm:$0x1] %v83
    %v85 = vld [vmem:[#allocation2] sm:$0x3]
    %v86 = vld [vmem:[#allocation3] sm:$0xff]
    %v87 = vld [vmem:[#allocation3 + $0x8] sm:$0xff]
    %v88 = vld [vmem:[#allocation3 + $0x10] sm:$0xff]
    %v89 = vld [vmem:[#allocation3 + $0x18] sm:$0xff]
    %v90 = vld [vmem:[#allocation3 + $0x20] sm:$0xff]
    %v91 = vld [vmem:[#allocation3 + $0x28] sm:$0xff]
    %v92 = vld [vmem:[#allocation3 + $0x30] sm:$0xff]
    %v93 = vld [vmem:[#allocation3 + $0x38] sm:$0xff]
    %v94 = vld [vmem:[#allocation3 + $0x40] sm:$0xff]
    %v95 = vld [vmem:[#allocation3 + $0x48] sm:$0xff]
    %v96 = vld [vmem:[#allocation3 + $0x50] sm:$0xff]
    %v97 = vld [vmem:[#allocation3 + $0x58] sm:$0xff]
    %v98 = vld [vmem:[#allocation3 + $0x60] sm:$0xff]
    %v99 = vld [vmem:[#allocation3 + $0x68] sm:$0xff]
    %v100 = vld [vmem:[#allocation3 + $0x70] sm:$0xff]
    %v101 = vld [vmem:[#allocation3 + $0x78] sm:$0xff]
    %v102 = vld [vmem:[#allocation3 + $0x80] sm:$0xff]
    %v103 = vld [vmem:[#allocation3 + $0x88] sm:$0xff]
    %v104 = vld [vmem:[#allocation3 + $0x90] sm:$0xff]
    %v105 = vld [vmem:[#allocation3 + $0x98] sm:$0xff]
    %v106 = vld [vmem:[#allocation3 + $0xa0] sm:$0xff]
    %v107 = vld [vmem:[#allocation3 + $0xa8] sm:$0xff]
    %v108 = vld [vmem:[#allocation3 + $0xb0] sm:$0xff]
    %v109 = vld [vmem:[#allocation3 + $0xb8] sm:$0xff]
    %v110 = vld [vmem:[#allocation3 + $0xc0] sm:$0xff]
    %v111 = vld [vmem:[#allocation3 + $0xc8] sm:$0xff]
    %v112 = vld [vmem:[#allocation3 + $0xd0] sm:$0xff]
    %v113 = vld [vmem:[#allocation3 + $0xd8] sm:$0xff]
    %v114 = vld [vmem:[#allocation3 + $0xe0] sm:$0xff]
    %v115 = vld [vmem:[#allocation3 + $0xe8] sm:$0xff]
    %v116 = vld [vmem:[#allocation3 + $0xf0] sm:$0xff]
    %v117 = vld [vmem:[#allocation3 + $0xf8] sm:$0xff]
    %v118 = vld [vmem:[#allocation3 + $0x100] sm:$0xff]
    %v119 = vld [vmem:[#allocation3 + $0x108] sm:$0xff]
    %v120 = vld [vmem:[#allocation3 + $0x110] sm:$0xff]
    %v121 = vld [vmem:[#allocation3 + $0x118] sm:$0xff]
    %v122 = vld [vmem:[#allocation3 + $0x120] sm:$0xff]
    %v123 = vld [vmem:[#allocation3 + $0x128] sm:$0xff]
    %v124 = vld [vmem:[#allocation3 + $0x130] sm:$0xff]
    %v125 = vld [vmem:[#allocation3 + $0x138] sm:$0xff]
    %v126 = vld [vmem:[#allocation3 + $0x140] sm:$0xff]
    %v127 = vld [vmem:[#allocation3 + $0x148] sm:$0xff]
    %v128 = vld [vmem:[#allocation3 + $0x150] sm:$0xff]
    %v129 = vld [vmem:[#allocation3 + $0x158] sm:$0xff]
    %v130 = vld [vmem:[#allocation3 + $0x160] sm:$0xff]
    %v131 = vld [vmem:[#allocation3 + $0x168] sm:$0xff]
    %v132 = vld [vmem:[#allocation3 + $0x170] sm:$0xff]
    %v133 = vld [vmem:[#allocation3 + $0x178] sm:$0xff]
    %v134 = vld [vmem:[#allocation3 + $0x180] sm:$0xff]
    %v135 = vld [vmem:[#allocation3 + $0x188] sm:$0xff]
    %v136 = vld [vmem:[#allocation3 + $0x190] sm:$0xff]
    %v137 = vld [vmem:[#allocation3 + $0x198] sm:$0xff]
    %v138 = vld [vmem:[#allocation3 + $0x1a0] sm:$0xff]
    %v139 = vld [vmem:[#allocation3 + $0x1a8] sm:$0xff]
    %v140 = vld [vmem:[#allocation3 + $0x1b0] sm:$0xff]
    %v141 = vld [vmem:[#allocation3 + $0x1b8] sm:$0xff]
    %v142 = vld [vmem:[#allocation3 + $0x1c0] sm:$0xff]
    %v143 = vld [vmem:[#allocation3 + $0x1c8] sm:$0xff]
    %v144 = vld [vmem:[#allocation3 + $0x1d0] sm:$0xff]
    %v145 = vld [vmem:[#allocation3 + $0x1d8] sm:$0xff]
    %v146 = vld [vmem:[#allocation3 + $0x1e0] sm:$0xff]
    %v147 = vld [vmem:[#allocation3 + $0x1e8] sm:$0xff]
    %v148 = vld [vmem:[#allocation3 + $0x1f0] sm:$0xff]
    %v149 = vld [vmem:[#allocation3 + $0x1f8] sm:$0xff]
    %v150 = vld [vmem:[%s4] sm:$0xf]
    %v152 = vlaneseq
    %v153 = vshrl.u32 %v152, 7
    %v154 = vsub.s32 0, %v153
    %v155 = vrot.slane %v150, %v154
    %v156 = vlaneseq
    %v157 = vshrl.u32 %v156, 7
    %v158 = vsub.s32 1, %v157
    %v159 = vrot.slane %v150, %v158
    %v160 = vlaneseq
    %v161 = vshrl.u32 %v160, 7
    %v162 = vsub.s32 2, %v161
    %v163 = vrot.slane %v150, %v162
    %v164 = vlaneseq
    %v165 = vshrl.u32 %v164, 7
    %v166 = vsub.s32 3, %v165
    %v167 = vrot.slane %v150, %v166
    %v174 = vunpack.c.l.s4 1966171168
    %v175 = vunpack.c.0.s8 %v174
    %v176 = vlaneseq
    %v177 = vshrl.u32 %v176, 7
    %v178 = vsub.s32 %v175, %v177
    %v179 = vrot.slane %v85, %v178
    %v180 = vcombine.high %v179, %v179
    %v182 = vunpack.c.l.s4 1966171168
    %v183 = vunpack.c.0.s8 %v182
    %v184 = vlaneseq
    %v185 = vshrl.u32 %v184, 7
    %v186 = vsub.s32 %v183, %v185
    %v187 = vrot.slane %v179, %v186
    %v189 = vunpack.c.l.s4 1966171168
    %v190 = vunpack.c.0.s8 %v189
    %v191 = vlaneseq
    %v192 = vshrl.u32 %v191, 7
    %v193 = vsub.s32 %v190, %v192
    %v194 = vrot.slane %v180, %v193
    %v261 = vunpack.c.l.b16 %v86
    %v262 = vunpack.c.h.b16 %v86
    %v263 = vunpack.c.l.b16 %v87
    %v264 = vunpack.c.h.b16 %v87
    %v265 = vunpack.c.l.b16 %v88
    %v266 = vunpack.c.h.b16 %v88
    %v267 = vunpack.c.l.b16 %v89
    %v268 = vunpack.c.h.b16 %v89
    %v269 = vunpack.c.l.b16 %v90
    %v270 = vunpack.c.h.b16 %v90
    %v271 = vunpack.c.l.b16 %v91
    %v272 = vunpack.c.h.b16 %v91
    %v273 = vunpack.c.l.b16 %v92
    %v274 = vunpack.c.h.b16 %v92
    %v275 = vunpack.c.l.b16 %v93
    %v276 = vunpack.c.h.b16 %v93
    %v277 = vunpack.c.l.b16 %v94
    %v278 = vunpack.c.h.b16 %v94
    %v279 = vunpack.c.l.b16 %v95
    %v280 = vunpack.c.h.b16 %v95
    %v281 = vunpack.c.l.b16 %v96
    %v282 = vunpack.c.h.b16 %v96
    %v283 = vunpack.c.l.b16 %v97
    %v284 = vunpack.c.h.b16 %v97
    %v285 = vunpack.c.l.b16 %v98
    %v286 = vunpack.c.h.b16 %v98
    %v287 = vunpack.c.l.b16 %v99
    %v288 = vunpack.c.h.b16 %v99
    %v289 = vunpack.c.l.b16 %v100
    %v290 = vunpack.c.h.b16 %v100
    %v291 = vunpack.c.l.b16 %v101
    %v292 = vunpack.c.h.b16 %v101
    %v293 = vunpack.c.l.b16 %v102
    %v294 = vunpack.c.h.b16 %v102
    %v295 = vunpack.c.l.b16 %v103
    %v296 = vunpack.c.h.b16 %v103
    %v297 = vunpack.c.l.b16 %v104
    %v298 = vunpack.c.h.b16 %v104
    %v299 = vunpack.c.l.b16 %v105
    %v300 = vunpack.c.h.b16 %v105
    %v301 = vunpack.c.l.b16 %v106
    %v302 = vunpack.c.h.b16 %v106
    %v303 = vunpack.c.l.b16 %v107
    %v304 = vunpack.c.h.b16 %v107
    %v305 = vunpack.c.l.b16 %v108
    %v306 = vunpack.c.h.b16 %v108
    %v307 = vunpack.c.l.b16 %v109
    %v308 = vunpack.c.h.b16 %v109
    %v309 = vunpack.c.l.b16 %v110
    %v310 = vunpack.c.h.b16 %v110
    %v311 = vunpack.c.l.b16 %v111
    %v312 = vunpack.c.h.b16 %v111
    %v313 = vunpack.c.l.b16 %v112
    %v314 = vunpack.c.h.b16 %v112
    %v315 = vunpack.c.l.b16 %v113
    %v316 = vunpack.c.h.b16 %v113
    %v317 = vunpack.c.l.b16 %v114
    %v318 = vunpack.c.h.b16 %v114
    %v319 = vunpack.c.l.b16 %v115
    %v320 = vunpack.c.h.b16 %v115
    %v321 = vunpack.c.l.b16 %v116
    %v322 = vunpack.c.h.b16 %v116
    %v323 = vunpack.c.l.b16 %v117
    %v324 = vunpack.c.h.b16 %v117
    %v325 = vunpack.c.l.b16 %v118
    %v326 = vunpack.c.h.b16 %v118
    %v327 = vunpack.c.l.b16 %v119
    %v328 = vunpack.c.h.b16 %v119
    %v329 = vunpack.c.l.b16 %v120
    %v330 = vunpack.c.h.b16 %v120
    %v331 = vunpack.c.l.b16 %v121
    %v332 = vunpack.c.h.b16 %v121
    %v333 = vunpack.c.l.b16 %v122
    %v334 = vunpack.c.h.b16 %v122
    %v335 = vunpack.c.l.b16 %v123
    %v336 = vunpack.c.h.b16 %v123
    %v337 = vunpack.c.l.b16 %v124
    %v338 = vunpack.c.h.b16 %v124
    %v339 = vunpack.c.l.b16 %v125
    %v340 = vunpack.c.h.b16 %v125
    %v341 = vunpack.c.l.b16 %v126
    %v342 = vunpack.c.h.b16 %v126
    %v343 = vunpack.c.l.b16 %v127
    %v344 = vunpack.c.h.b16 %v127
    %v345 = vunpack.c.l.b16 %v128
    %v346 = vunpack.c.h.b16 %v128
    %v347 = vunpack.c.l.b16 %v129
    %v348 = vunpack.c.h.b16 %v129
    %v349 = vunpack.c.l.b16 %v130
    %v350 = vunpack.c.h.b16 %v130
    %v351 = vunpack.c.l.b16 %v131
    %v352 = vunpack.c.h.b16 %v131
    %v353 = vunpack.c.l.b16 %v132
    %v354 = vunpack.c.h.b16 %v132
    %v355 = vunpack.c.l.b16 %v133
    %v356 = vunpack.c.h.b16 %v133
    %v357 = vunpack.c.l.b16 %v134
    %v358 = vunpack.c.h.b16 %v134
    %v359 = vunpack.c.l.b16 %v135
    %v360 = vunpack.c.h.b16 %v135
    %v361 = vunpack.c.l.b16 %v136
    %v362 = vunpack.c.h.b16 %v136
    %v363 = vunpack.c.l.b16 %v137
    %v364 = vunpack.c.h.b16 %v137
    %v365 = vunpack.c.l.b16 %v138
    %v366 = vunpack.c.h.b16 %v138
    %v367 = vunpack.c.l.b16 %v139
    %v368 = vunpack.c.h.b16 %v139
    %v369 = vunpack.c.l.b16 %v140
    %v370 = vunpack.c.h.b16 %v140
    %v371 = vunpack.c.l.b16 %v141
    %v372 = vunpack.c.h.b16 %v141
    %v373 = vunpack.c.l.b16 %v142
    %v374 = vunpack.c.h.b16 %v142
    %v375 = vunpack.c.l.b16 %v143
    %v376 = vunpack.c.h.b16 %v143
    %v377 = vunpack.c.l.b16 %v144
    %v378 = vunpack.c.h.b16 %v144
    %v379 = vunpack.c.l.b16 %v145
    %v380 = vunpack.c.h.b16 %v145
    %v381 = vunpack.c.l.b16 %v146
    %v382 = vunpack.c.h.b16 %v146
    %v383 = vunpack.c.l.b16 %v147
    %v384 = vunpack.c.h.b16 %v147
    %v385 = vunpack.c.l.b16 %v148
    %v386 = vunpack.c.h.b16 %v148
    %v387 = vunpack.c.l.b16 %v149
    %v388 = vunpack.c.h.b16 %v149
    %v389 = vpack.c.b16 %v265, %v261
    %v390 = vpack.c.b16 %v266, %v262
    %v391 = vpack.c.b16 %v267, %v263
    %v392 = vpack.c.b16 %v268, %v264
    %v393 = vpack.c.b16 %v273, %v269
    %v394 = vpack.c.b16 %v274, %v270
    %v395 = vpack.c.b16 %v275, %v271
    %v396 = vpack.c.b16 %v276, %v272
    %v397 = vpack.c.b16 %v281, %v277
    %v398 = vpack.c.b16 %v282, %v278
    %v399 = vpack.c.b16 %v283, %v279
    %v400 = vpack.c.b16 %v284, %v280
    %v401 = vpack.c.b16 %v289, %v285
    %v402 = vpack.c.b16 %v290, %v286
    %v403 = vpack.c.b16 %v291, %v287
    %v404 = vpack.c.b16 %v292, %v288
    %v405 = vpack.c.b16 %v297, %v293
    %v406 = vpack.c.b16 %v298, %v294
    %v407 = vpack.c.b16 %v299, %v295
    %v408 = vpack.c.b16 %v300, %v296
    %v409 = vpack.c.b16 %v305, %v301
    %v410 = vpack.c.b16 %v306, %v302
    %v411 = vpack.c.b16 %v307, %v303
    %v412 = vpack.c.b16 %v308, %v304
    %v413 = vpack.c.b16 %v313, %v309
    %v414 = vpack.c.b16 %v314, %v310
    %v415 = vpack.c.b16 %v315, %v311
    %v416 = vpack.c.b16 %v316, %v312
    %v417 = vpack.c.b16 %v321, %v317
    %v418 = vpack.c.b16 %v322, %v318
    %v419 = vpack.c.b16 %v323, %v319
    %v420 = vpack.c.b16 %v324, %v320
    %v421 = vpack.c.b16 %v329, %v325
    %v422 = vpack.c.b16 %v330, %v326
    %v423 = vpack.c.b16 %v331, %v327
    %v424 = vpack.c.b16 %v332, %v328
    %v425 = vpack.c.b16 %v337, %v333
    %v426 = vpack.c.b16 %v338, %v334
    %v427 = vpack.c.b16 %v339, %v335
    %v428 = vpack.c.b16 %v340, %v336
    %v429 = vpack.c.b16 %v345, %v341
    %v430 = vpack.c.b16 %v346, %v342
    %v431 = vpack.c.b16 %v347, %v343
    %v432 = vpack.c.b16 %v348, %v344
    %v433 = vpack.c.b16 %v353, %v349
    %v434 = vpack.c.b16 %v354, %v350
    %v435 = vpack.c.b16 %v355, %v351
    %v436 = vpack.c.b16 %v356, %v352
    %v437 = vpack.c.b16 %v361, %v357
    %v438 = vpack.c.b16 %v362, %v358
    %v439 = vpack.c.b16 %v363, %v359
    %v440 = vpack.c.b16 %v364, %v360
    %v441 = vpack.c.b16 %v369, %v365
    %v442 = vpack.c.b16 %v370, %v366
    %v443 = vpack.c.b16 %v371, %v367
    %v444 = vpack.c.b16 %v372, %v368
    %v445 = vpack.c.b16 %v377, %v373
    %v446 = vpack.c.b16 %v378, %v374
    %v447 = vpack.c.b16 %v379, %v375
    %v448 = vpack.c.b16 %v380, %v376
    %v449 = vpack.c.b16 %v385, %v381
    %v450 = vpack.c.b16 %v386, %v382
    %v451 = vpack.c.b16 %v387, %v383
    %v452 = vpack.c.b16 %v388, %v384
    %517 = vmatprep.subr.bf16.mxu0 %v418
    %518 = vmatpush1.bf16.msra.mxu0 %v417
    %519 = vmatprep.subr.bf16.mxu0 %v414
    %520 = vmatpush1.bf16.msra.mxu0 %v413
    %521 = vmatprep.subr.bf16.mxu0 %v410
    %522 = vmatpush1.bf16.msra.mxu0 %v409
    %523 = vmatprep.subr.bf16.mxu0 %v406
    %524 = vmatpush1.bf16.msra.mxu0 %v405
    %525 = vmatprep.subr.bf16.mxu0 %v402
    %526 = vmatpush1.bf16.msra.mxu0 %v401
    %527 = vmatprep.subr.bf16.mxu0 %v398
    %528 = vmatpush1.bf16.msra.mxu0 %v397
    %529 = vmatprep.subr.bf16.mxu0 %v394
    %530 = vmatpush1.bf16.msra.mxu0 %v393
    %531 = vmatprep.subr.bf16.mxu0 %v390
    %532 = vmatpush1.bf16.msra.mxu0 %v389
    %533 = vmatprep.subr.bf16.mxu0 %v450
    %534 = vmatpush2.bf16.msra.mxu0 %v449
    %535 = vmatprep.subr.bf16.mxu0 %v446
    %536 = vmatpush2.bf16.msra.mxu0 %v445
    %537 = vmatprep.subr.bf16.mxu0 %v442
    %538 = vmatpush2.bf16.msra.mxu0 %v441
    %539 = vmatprep.subr.bf16.mxu0 %v438
    %540 = vmatpush2.bf16.msra.mxu0 %v437
    %541 = vmatprep.subr.bf16.mxu0 %v434
    %542 = vmatpush2.bf16.msra.mxu0 %v433
    %543 = vmatprep.subr.bf16.mxu0 %v430
    %544 = vmatpush2.bf16.msra.mxu0 %v429
    %545 = vmatprep.subr.bf16.mxu0 %v426
    %546 = vmatpush2.bf16.msra.mxu0 %v425
    %547 = vmatprep.subr.bf16.mxu0 %v422
    %548 = vmatpush2.bf16.msra.mxu0 %v421
    %549 = vmatprep.mubr.bf16.mxu0 %v194
    %550 = vmatmul.mubr.bf16.gmra.mxu0 %v187
    %v551 = vpop.f32.mrf.mxu0
    %v552 = vadd.f32 %v155, %v551
    %v553 = vpop.f32.mrf.mxu0
    %v554 = vadd.f32 %v159, %v553
    %v555 = vpop.f32.mrf.mxu0
    %v556 = vpop.f32.mrf.mxu0
    %557 = vdwg.mxu0
    %558 = vmatprep.subr.bf16.mxu0 %v420
    %559 = vmatpush1.bf16.msra.mxu0 %v419
    %560 = vmatprep.subr.bf16.mxu0 %v416
    %561 = vmatpush1.bf16.msra.mxu0 %v415
    %562 = vmatprep.subr.bf16.mxu0 %v412
    %563 = vmatpush1.bf16.msra.mxu0 %v411
    %564 = vmatprep.subr.bf16.mxu0 %v408
    %565 = vmatpush1.bf16.msra.mxu0 %v407
    %566 = vmatprep.subr.bf16.mxu0 %v404
    %567 = vmatpush1.bf16.msra.mxu0 %v403
    %568 = vmatprep.subr.bf16.mxu0 %v400
    %569 = vmatpush1.bf16.msra.mxu0 %v399
    %570 = vmatprep.subr.bf16.mxu0 %v396
    %571 = vmatpush1.bf16.msra.mxu0 %v395
    %572 = vmatprep.subr.bf16.mxu0 %v392
    %573 = vmatpush1.bf16.msra.mxu0 %v391
    %574 = vmatprep.subr.bf16.mxu0 %v452
    %575 = vmatpush2.bf16.msra.mxu0 %v451
    %576 = vmatprep.subr.bf16.mxu0 %v448
    %577 = vmatpush2.bf16.msra.mxu0 %v447
    %578 = vmatprep.subr.bf16.mxu0 %v444
    %579 = vmatpush2.bf16.msra.mxu0 %v443
    %580 = vmatprep.subr.bf16.mxu0 %v440
    %581 = vmatpush2.bf16.msra.mxu0 %v439
    %582 = vmatprep.subr.bf16.mxu0 %v436
    %583 = vmatpush2.bf16.msra.mxu0 %v435
    %584 = vmatprep.subr.bf16.mxu0 %v432
    %585 = vmatpush2.bf16.msra.mxu0 %v431
    %586 = vmatprep.subr.bf16.mxu0 %v428
    %587 = vmatpush2.bf16.msra.mxu0 %v427
    %588 = vmatprep.subr.bf16.mxu0 %v424
    %589 = vmatpush2.bf16.msra.mxu0 %v423
    %590 = vmatprep.mubr.bf16.mxu0 %v194
    %591 = vmatmul.mubr.bf16.gmra.mxu0 %v187
    %v592 = vpop.f32.mrf.mxu0
    %v593 = vadd.f32 %v163, %v592
    %v594 = vpop.f32.mrf.mxu0
    %v595 = vadd.f32 %v167, %v594
    %v596 = vpop.f32.mrf.mxu0
    %v597 = vpop.f32.mrf.mxu0
    %598 = vdwg.mxu0
    %v599 = vxor.u32 %v552, 2147483648
    %v600 = vmul.f32 %v599, 1.442695
    %v601 = vpow.pop %v600
    %v602 = vadd.f32 %v601, 1.0
    %v603 = vrcp.pop %v602
    %v604 = vmul.f32 1.0, %v603
    %v605 = vxor.u32 %v554, 2147483648
    %v606 = vmul.f32 %v605, 1.442695
    %v607 = vpow.pop %v606
    %v608 = vadd.f32 %v607, 1.0
    %v609 = vrcp.pop %v608
    %v610 = vmul.f32 1.0, %v609
    %v611 = vtanh.pop %v593
    %v612 = vxor.u32 %v595, 2147483648
    %v613 = vmul.f32 %v612, 1.442695
    %v614 = vpow.pop %v613
    %v615 = vadd.f32 %v614, 1.0
    %v616 = vrcp.pop %v615
    %v617 = vmul.f32 1.0, %v616
    %v618 = vmul.f32 %v610, %v82
    %v619 = vmul.f32 %v604, %v611
    %v620 = vadd.f32 %v618, %v619
    %v621 = vtanh.pop %v620
    %v622 = vmul.f32 %v617, %v621
    %623 = vst [vmem:[%s10] sm:$0x3] %v622
    %624 = vst [vmem:[%s11] sm:$0x3] %v620
    %v625 = vpack.c.bf16 %v622, %v622
    %626 = vst [vmem:[#allocation2] sm:$0x1] %v625
    %s627 = scalar_lea.vmem %s1, 2
    %v628 = vld [vmem:[%s627] sm:$0x3]
    %s629 = scalar_lea.vmem %s2, 2
    %v630 = vld [vmem:[%s629] sm:$0x3]
    %v631 = vpack.c.bf16 %v628, %v628
    %632 = vst [vmem:[#allocation2 + $0x1] sm:$0x1] %v631
    %v633 = vld [vmem:[#allocation2] sm:$0x3]
    %v634 = vld [vmem:[#allocation6] sm:$0xff]
    %v635 = vld [vmem:[#allocation6 + $0x8] sm:$0xff]
    %v636 = vld [vmem:[#allocation6 + $0x10] sm:$0xff]
    %v637 = vld [vmem:[#allocation6 + $0x18] sm:$0xff]
    %v638 = vld [vmem:[#allocation6 + $0x20] sm:$0xff]
    %v639 = vld [vmem:[#allocation6 + $0x28] sm:$0xff]
    %v640 = vld [vmem:[#allocation6 + $0x30] sm:$0xff]
    %v641 = vld [vmem:[#allocation6 + $0x38] sm:$0xff]
    %v642 = vld [vmem:[#allocation6 + $0x40] sm:$0xff]
    %v643 = vld [vmem:[#allocation6 + $0x48] sm:$0xff]
    %v644 = vld [vmem:[#allocation6 + $0x50] sm:$0xff]
    %v645 = vld [vmem:[#allocation6 + $0x58] sm:$0xff]
    %v646 = vld [vmem:[#allocation6 + $0x60] sm:$0xff]
    %v647 = vld [vmem:[#allocation6 + $0x68] sm:$0xff]
    %v648 = vld [vmem:[#allocation6 + $0x70] sm:$0xff]
    %v649 = vld [vmem:[#allocation6 + $0x78] sm:$0xff]
    %v650 = vld [vmem:[#allocation6 + $0x80] sm:$0xff]
    %v651 = vld [vmem:[#allocation6 + $0x88] sm:$0xff]
    %v652 = vld [vmem:[#allocation6 + $0x90] sm:$0xff]
    %v653 = vld [vmem:[#allocation6 + $0x98] sm:$0xff]
    %v654 = vld [vmem:[#allocation6 + $0xa0] sm:$0xff]
    %v655 = vld [vmem:[#allocation6 + $0xa8] sm:$0xff]
    %v656 = vld [vmem:[#allocation6 + $0xb0] sm:$0xff]
    %v657 = vld [vmem:[#allocation6 + $0xb8] sm:$0xff]
    %v658 = vld [vmem:[#allocation6 + $0xc0] sm:$0xff]
    %v659 = vld [vmem:[#allocation6 + $0xc8] sm:$0xff]
    %v660 = vld [vmem:[#allocation6 + $0xd0] sm:$0xff]
    %v661 = vld [vmem:[#allocation6 + $0xd8] sm:$0xff]
    %v662 = vld [vmem:[#allocation6 + $0xe0] sm:$0xff]
    %v663 = vld [vmem:[#allocation6 + $0xe8] sm:$0xff]
    %v664 = vld [vmem:[#allocation6 + $0xf0] sm:$0xff]
    %v665 = vld [vmem:[#allocation6 + $0xf8] sm:$0xff]
    %v666 = vld [vmem:[#allocation6 + $0x100] sm:$0xff]
    %v667 = vld [vmem:[#allocation6 + $0x108] sm:$0xff]
    %v668 = vld [vmem:[#allocation6 + $0x110] sm:$0xff]
    %v669 = vld [vmem:[#allocation6 + $0x118] sm:$0xff]
    %v670 = vld [vmem:[#allocation6 + $0x120] sm:$0xff]
    %v671 = vld [vmem:[#allocation6 + $0x128] sm:$0xff]
    %v672 = vld [vmem:[#allocation6 + $0x130] sm:$0xff]
    %v673 = vld [vmem:[#allocation6 + $0x138] sm:$0xff]
    %v674 = vld [vmem:[#allocation6 + $0x140] sm:$0xff]
    %v675 = vld [vmem:[#allocation6 + $0x148] sm:$0xff]
    %v676 = vld [vmem:[#allocation6 + $0x150] sm:$0xff]
    %v677 = vld [vmem:[#allocation6 + $0x158] sm:$0xff]
    %v678 = vld [vmem:[#allocation6 + $0x160] sm:$0xff]
    %v679 = vld [vmem:[#allocation6 + $0x168] sm:$0xff]
    %v680 = vld [vmem:[#allocation6 + $0x170] sm:$0xff]
    %v681 = vld [vmem:[#allocation6 + $0x178] sm:$0xff]
    %v682 = vld [vmem:[#allocation6 + $0x180] sm:$0xff]
    %v683 = vld [vmem:[#allocation6 + $0x188] sm:$0xff]
    %v684 = vld [vmem:[#allocation6 + $0x190] sm:$0xff]
    %v685 = vld [vmem:[#allocation6 + $0x198] sm:$0xff]
    %v686 = vld [vmem:[#allocation6 + $0x1a0] sm:$0xff]
    %v687 = vld [vmem:[#allocation6 + $0x1a8] sm:$0xff]
    %v688 = vld [vmem:[#allocation6 + $0x1b0] sm:$0xff]
    %v689 = vld [vmem:[#allocation6 + $0x1b8] sm:$0xff]
    %v690 = vld [vmem:[#allocation6 + $0x1c0] sm:$0xff]
    %v691 = vld [vmem:[#allocation6 + $0x1c8] sm:$0xff]
    %v692 = vld [vmem:[#allocation6 + $0x1d0] sm:$0xff]
    %v693 = vld [vmem:[#allocation6 + $0x1d8] sm:$0xff]
    %v694 = vld [vmem:[#allocation6 + $0x1e0] sm:$0xff]
    %v695 = vld [vmem:[#allocation6 + $0x1e8] sm:$0xff]
    %v696 = vld [vmem:[#allocation6 + $0x1f0] sm:$0xff]
    %v697 = vld [vmem:[#allocation6 + $0x1f8] sm:$0xff]
    %v698 = vld [vmem:[%s6] sm:$0xf]
    %v700 = vlaneseq
    %v701 = vshrl.u32 %v700, 7
    %v702 = vsub.s32 0, %v701
    %v703 = vrot.slane %v698, %v702
    %v704 = vlaneseq
    %v705 = vshrl.u32 %v704, 7
    %v706 = vsub.s32 1, %v705
    %v707 = vrot.slane %v698, %v706
    %v708 = vlaneseq
    %v709 = vshrl.u32 %v708, 7
    %v710 = vsub.s32 2, %v709
    %v711 = vrot.slane %v698, %v710
    %v712 = vlaneseq
    %v713 = vshrl.u32 %v712, 7
    %v714 = vsub.s32 3, %v713
    %v715 = vrot.slane %v698, %v714
    %v722 = vunpack.c.l.s4 1966171168
    %v723 = vunpack.c.0.s8 %v722
    %v724 = vlaneseq
    %v725 = vshrl.u32 %v724, 7
    %v726 = vsub.s32 %v723, %v725
    %v727 = vrot.slane %v633, %v726
    %v728 = vcombine.high %v727, %v727
    %v730 = vunpack.c.l.s4 1966171168
    %v731 = vunpack.c.0.s8 %v730
    %v732 = vlaneseq
    %v733 = vshrl.u32 %v732, 7
    %v734 = vsub.s32 %v731, %v733
    %v735 = vrot.slane %v727, %v734
    %v737 = vunpack.c.l.s4 1966171168
    %v738 = vunpack.c.0.s8 %v737
    %v739 = vlaneseq
    %v740 = vshrl.u32 %v739, 7
    %v741 = vsub.s32 %v738, %v740
    %v742 = vrot.slane %v728, %v741
    %v809 = vunpack.c.l.b16 %v634
    %v810 = vunpack.c.h.b16 %v634
    %v811 = vunpack.c.l.b16 %v635
    %v812 = vunpack.c.h.b16 %v635
    %v813 = vunpack.c.l.b16 %v636
    %v814 = vunpack.c.h.b16 %v636
    %v815 = vunpack.c.l.b16 %v637
    %v816 = vunpack.c.h.b16 %v637
    %v817 = vunpack.c.l.b16 %v638
    %v818 = vunpack.c.h.b16 %v638
    %v819 = vunpack.c.l.b16 %v639
    %v820 = vunpack.c.h.b16 %v639
    %v821 = vunpack.c.l.b16 %v640
    %v822 = vunpack.c.h.b16 %v640
    %v823 = vunpack.c.l.b16 %v641
    %v824 = vunpack.c.h.b16 %v641
    %v825 = vunpack.c.l.b16 %v642
    %v826 = vunpack.c.h.b16 %v642
    %v827 = vunpack.c.l.b16 %v643
    %v828 = vunpack.c.h.b16 %v643
    %v829 = vunpack.c.l.b16 %v644
    %v830 = vunpack.c.h.b16 %v644
    %v831 = vunpack.c.l.b16 %v645
    %v832 = vunpack.c.h.b16 %v645
    %v833 = vunpack.c.l.b16 %v646
    %v834 = vunpack.c.h.b16 %v646
    %v835 = vunpack.c.l.b16 %v647
    %v836 = vunpack.c.h.b16 %v647
    %v837 = vunpack.c.l.b16 %v648
    %v838 = vunpack.c.h.b16 %v648
    %v839 = vunpack.c.l.b16 %v649
    %v840 = vunpack.c.h.b16 %v649
    %v841 = vunpack.c.l.b16 %v650
    %v842 = vunpack.c.h.b16 %v650
    %v843 = vunpack.c.l.b16 %v651
    %v844 = vunpack.c.h.b16 %v651
    %v845 = vunpack.c.l.b16 %v652
    %v846 = vunpack.c.h.b16 %v652
    %v847 = vunpack.c.l.b16 %v653
    %v848 = vunpack.c.h.b16 %v653
    %v849 = vunpack.c.l.b16 %v654
    %v850 = vunpack.c.h.b16 %v654
    %v851 = vunpack.c.l.b16 %v655
    %v852 = vunpack.c.h.b16 %v655
    %v853 = vunpack.c.l.b16 %v656
    %v854 = vunpack.c.h.b16 %v656
    %v855 = vunpack.c.l.b16 %v657
    %v856 = vunpack.c.h.b16 %v657
    %v857 = vunpack.c.l.b16 %v658
    %v858 = vunpack.c.h.b16 %v658
    %v859 = vunpack.c.l.b16 %v659
    %v860 = vunpack.c.h.b16 %v659
    %v861 = vunpack.c.l.b16 %v660
    %v862 = vunpack.c.h.b16 %v660
    %v863 = vunpack.c.l.b16 %v661
    %v864 = vunpack.c.h.b16 %v661
    %v865 = vunpack.c.l.b16 %v662
    %v866 = vunpack.c.h.b16 %v662
    %v867 = vunpack.c.l.b16 %v663
    %v868 = vunpack.c.h.b16 %v663
    %v869 = vunpack.c.l.b16 %v664
    %v870 = vunpack.c.h.b16 %v664
    %v871 = vunpack.c.l.b16 %v665
    %v872 = vunpack.c.h.b16 %v665
    %v873 = vunpack.c.l.b16 %v666
    %v874 = vunpack.c.h.b16 %v666
    %v875 = vunpack.c.l.b16 %v667
    %v876 = vunpack.c.h.b16 %v667
    %v877 = vunpack.c.l.b16 %v668
    %v878 = vunpack.c.h.b16 %v668
    %v879 = vunpack.c.l.b16 %v669
    %v880 = vunpack.c.h.b16 %v669
    %v881 = vunpack.c.l.b16 %v670
    %v882 = vunpack.c.h.b16 %v670
    %v883 = vunpack.c.l.b16 %v671
    %v884 = vunpack.c.h.b16 %v671
    %v885 = vunpack.c.l.b16 %v672
    %v886 = vunpack.c.h.b16 %v672
    %v887 = vunpack.c.l.b16 %v673
    %v888 = vunpack.c.h.b16 %v673
    %v889 = vunpack.c.l.b16 %v674
    %v890 = vunpack.c.h.b16 %v674
    %v891 = vunpack.c.l.b16 %v675
    %v892 = vunpack.c.h.b16 %v675
    %v893 = vunpack.c.l.b16 %v676
    %v894 = vunpack.c.h.b16 %v676
    %v895 = vunpack.c.l.b16 %v677
    %v896 = vunpack.c.h.b16 %v677
    %v897 = vunpack.c.l.b16 %v678
    %v898 = vunpack.c.h.b16 %v678
    %v899 = vunpack.c.l.b16 %v679
    %v900 = vunpack.c.h.b16 %v679
    %v901 = vunpack.c.l.b16 %v680
    %v902 = vunpack.c.h.b16 %v680
    %v903 = vunpack.c.l.b16 %v681
    %v904 = vunpack.c.h.b16 %v681
    %v905 = vunpack.c.l.b16 %v682
    %v906 = vunpack.c.h.b16 %v682
    %v907 = vunpack.c.l.b16 %v683
    %v908 = vunpack.c.h.b16 %v683
    %v909 = vunpack.c.l.b16 %v684
    %v910 = vunpack.c.h.b16 %v684
    %v911 = vunpack.c.l.b16 %v685
    %v912 = vunpack.c.h.b16 %v685
    %v913 = vunpack.c.l.b16 %v686
    %v914 = vunpack.c.h.b16 %v686
    %v915 = vunpack.c.l.b16 %v687
    %v916 = vunpack.c.h.b16 %v687
    %v917 = vunpack.c.l.b16 %v688
    %v918 = vunpack.c.h.b16 %v688
    %v919 = vunpack.c.l.b16 %v689
    %v920 = vunpack.c.h.b16 %v689
    %v921 = vunpack.c.l.b16 %v690
    %v922 = vunpack.c.h.b16 %v690
    %v923 = vunpack.c.l.b16 %v691
    %v924 = vunpack.c.h.b16 %v691
    %v925 = vunpack.c.l.b16 %v692
    %v926 = vunpack.c.h.b16 %v692
    %v927 = vunpack.c.l.b16 %v693
    %v928 = vunpack.c.h.b16 %v693
    %v929 = vunpack.c.l.b16 %v694
    %v930 = vunpack.c.h.b16 %v694
    %v931 = vunpack.c.l.b16 %v695
    %v932 = vunpack.c.h.b16 %v695
    %v933 = vunpack.c.l.b16 %v696
    %v934 = vunpack.c.h.b16 %v696
    %v935 = vunpack.c.l.b16 %v697
    %v936 = vunpack.c.h.b16 %v697
    %v937 = vpack.c.b16 %v813, %v809
    %v938 = vpack.c.b16 %v814, %v810
    %v939 = vpack.c.b16 %v815, %v811
    %v940 = vpack.c.b16 %v816, %v812
    %v941 = vpack.c.b16 %v821, %v817
    %v942 = vpack.c.b16 %v822, %v818
    %v943 = vpack.c.b16 %v823, %v819
    %v944 = vpack.c.b16 %v824, %v820
    %v945 = vpack.c.b16 %v829, %v825
    %v946 = vpack.c.b16 %v830, %v826
    %v947 = vpack.c.b16 %v831, %v827
    %v948 = vpack.c.b16 %v832, %v828
    %v949 = vpack.c.b16 %v837, %v833
    %v950 = vpack.c.b16 %v838, %v834
    %v951 = vpack.c.b16 %v839, %v835
    %v952 = vpack.c.b16 %v840, %v836
    %v953 = vpack.c.b16 %v845, %v841
    %v954 = vpack.c.b16 %v846, %v842
    %v955 = vpack.c.b16 %v847, %v843
    %v956 = vpack.c.b16 %v848, %v844
    %v957 = vpack.c.b16 %v853, %v849
    %v958 = vpack.c.b16 %v854, %v850
    %v959 = vpack.c.b16 %v855, %v851
    %v960 = vpack.c.b16 %v856, %v852
    %v961 = vpack.c.b16 %v861, %v857
    %v962 = vpack.c.b16 %v862, %v858
    %v963 = vpack.c.b16 %v863, %v859
    %v964 = vpack.c.b16 %v864, %v860
    %v965 = vpack.c.b16 %v869, %v865
    %v966 = vpack.c.b16 %v870, %v866
    %v967 = vpack.c.b16 %v871, %v867
    %v968 = vpack.c.b16 %v872, %v868
    %v969 = vpack.c.b16 %v877, %v873
    %v970 = vpack.c.b16 %v878, %v874
    %v971 = vpack.c.b16 %v879, %v875
    %v972 = vpack.c.b16 %v880, %v876
    %v973 = vpack.c.b16 %v885, %v881
    %v974 = vpack.c.b16 %v886, %v882
    %v975 = vpack.c.b16 %v887, %v883
    %v976 = vpack.c.b16 %v888, %v884
    %v977 = vpack.c.b16 %v893, %v889
    %v978 = vpack.c.b16 %v894, %v890
    %v979 = vpack.c.b16 %v895, %v891
    %v980 = vpack.c.b16 %v896, %v892
    %v981 = vpack.c.b16 %v901, %v897
    %v982 = vpack.c.b16 %v902, %v898
    %v983 = vpack.c.b16 %v903, %v899
    %v984 = vpack.c.b16 %v904, %v900
    %v985 = vpack.c.b16 %v909, %v905
    %v986 = vpack.c.b16 %v910, %v906
    %v987 = vpack.c.b16 %v911, %v907
    %v988 = vpack.c.b16 %v912, %v908
    %v989 = vpack.c.b16 %v917, %v913
    %v990 = vpack.c.b16 %v918, %v914
    %v991 = vpack.c.b16 %v919, %v915
    %v992 = vpack.c.b16 %v920, %v916
    %v993 = vpack.c.b16 %v925, %v921
    %v994 = vpack.c.b16 %v926, %v922
    %v995 = vpack.c.b16 %v927, %v923
    %v996 = vpack.c.b16 %v928, %v924
    %v997 = vpack.c.b16 %v933, %v929
    %v998 = vpack.c.b16 %v934, %v930
    %v999 = vpack.c.b16 %v935, %v931
    %v1000 = vpack.c.b16 %v936, %v932
    %1065 = vmatprep.subr.bf16.mxu0 %v966
    %1066 = vmatpush1.bf16.msra.mxu0 %v965
    %1067 = vmatprep.subr.bf16.mxu0 %v962
    %1068 = vmatpush1.bf16.msra.mxu0 %v961
    %1069 = vmatprep.subr.bf16.mxu0 %v958
    %1070 = vmatpush1.bf16.msra.mxu0 %v957
    %1071 = vmatprep.subr.bf16.mxu0 %v954
    %1072 = vmatpush1.bf16.msra.mxu0 %v953
    %1073 = vmatprep.subr.bf16.mxu0 %v950
    %1074 = vmatpush1.bf16.msra.mxu0 %v949
    %1075 = vmatprep.subr.bf16.mxu0 %v946
    %1076 = vmatpush1.bf16.msra.mxu0 %v945
    %1077 = vmatprep.subr.bf16.mxu0 %v942
    %1078 = vmatpush1.bf16.msra.mxu0 %v941
    %1079 = vmatprep.subr.bf16.mxu0 %v938
    %1080 = vmatpush1.bf16.msra.mxu0 %v937
    %1081 = vmatprep.subr.bf16.mxu0 %v998
    %1082 = vmatpush2.bf16.msra.mxu0 %v997
    %1083 = vmatprep.subr.bf16.mxu0 %v994
    %1084 = vmatpush2.bf16.msra.mxu0 %v993
    %1085 = vmatprep.subr.bf16.mxu0 %v990
    %1086 = vmatpush2.bf16.msra.mxu0 %v989
    %1087 = vmatprep.subr.bf16.mxu0 %v986
    %1088 = vmatpush2.bf16.msra.mxu0 %v985
    %1089 = vmatprep.subr.bf16.mxu0 %v982
    %1090 = vmatpush2.bf16.msra.mxu0 %v981
    %1091 = vmatprep.subr.bf16.mxu0 %v978
    %1092 = vmatpush2.bf16.msra.mxu0 %v977
    %1093 = vmatprep.subr.bf16.mxu0 %v974
    %1094 = vmatpush2.bf16.msra.mxu0 %v973
    %1095 = vmatprep.subr.bf16.mxu0 %v970
    %1096 = vmatpush2.bf16.msra.mxu0 %v969
    %1097 = vmatprep.mubr.bf16.mxu0 %v742
    %1098 = vmatmul.mubr.bf16.gmra.mxu0 %v735
    %v1099 = vpop.f32.mrf.mxu0
    %v1100 = vadd.f32 %v703, %v1099
    %v1101 = vpop.f32.mrf.mxu0
    %v1102 = vadd.f32 %v707, %v1101
    %v1103 = vpop.f32.mrf.mxu0
    %v1104 = vpop.f32.mrf.mxu0
    %1105 = vdwg.mxu0
    %1106 = vmatprep.subr.bf16.mxu0 %v968
    %1107 = vmatpush1.bf16.msra.mxu0 %v967
    %1108 = vmatprep.subr.bf16.mxu0 %v964
    %1109 = vmatpush1.bf16.msra.mxu0 %v963
    %1110 = vmatprep.subr.bf16.mxu0 %v960
    %1111 = vmatpush1.bf16.msra.mxu0 %v959
    %1112 = vmatprep.subr.bf16.mxu0 %v956
    %1113 = vmatpush1.bf16.msra.mxu0 %v955
    %1114 = vmatprep.subr.bf16.mxu0 %v952
    %1115 = vmatpush1.bf16.msra.mxu0 %v951
    %1116 = vmatprep.subr.bf16.mxu0 %v948
    %1117 = vmatpush1.bf16.msra.mxu0 %v947
    %1118 = vmatprep.subr.bf16.mxu0 %v944
    %1119 = vmatpush1.bf16.msra.mxu0 %v943
    %1120 = vmatprep.subr.bf16.mxu0 %v940
    %1121 = vmatpush1.bf16.msra.mxu0 %v939
    %1122 = vmatprep.subr.bf16.mxu0 %v1000
    %1123 = vmatpush2.bf16.msra.mxu0 %v999
    %1124 = vmatprep.subr.bf16.mxu0 %v996
    %1125 = vmatpush2.bf16.msra.mxu0 %v995
    %1126 = vmatprep.subr.bf16.mxu0 %v992
    %1127 = vmatpush2.bf16.msra.mxu0 %v991
    %1128 = vmatprep.subr.bf16.mxu0 %v988
    %1129 = vmatpush2.bf16.msra.mxu0 %v987
    %1130 = vmatprep.subr.bf16.mxu0 %v984
    %1131 = vmatpush2.bf16.msra.mxu0 %v983
    %1132 = vmatprep.subr.bf16.mxu0 %v980
    %1133 = vmatpush2.bf16.msra.mxu0 %v979
    %1134 = vmatprep.subr.bf16.mxu0 %v976
    %1135 = vmatpush2.bf16.msra.mxu0 %v975
    %1136 = vmatprep.subr.bf16.mxu0 %v972
    %1137 = vmatpush2.bf16.msra.mxu0 %v971
    %1138 = vmatprep.mubr.bf16.mxu0 %v742
    %1139 = vmatmul.mubr.bf16.gmra.mxu0 %v735
    %v1140 = vpop.f32.mrf.mxu0
    %v1141 = vadd.f32 %v711, %v1140
    %v1142 = vpop.f32.mrf.mxu0
    %v1143 = vadd.f32 %v715, %v1142
    %v1144 = vpop.f32.mrf.mxu0
    %v1145 = vpop.f32.mrf.mxu0
    %1146 = vdwg.mxu0
    %v1147 = vxor.u32 %v1100, 2147483648
    %v1148 = vmul.f32 %v1147, 1.442695
    %v1149 = vpow.pop %v1148
    %v1150 = vadd.f32 %v1149, 1.0
    %v1151 = vrcp.pop %v1150
    %v1152 = vmul.f32 1.0, %v1151
    %v1153 = vxor.u32 %v1102, 2147483648
    %v1154 = vmul.f32 %v1153, 1.442695
    %v1155 = vpow.pop %v1154
    %v1156 = vadd.f32 %v1155, 1.0
    %v1157 = vrcp.pop %v1156
    %v1158 = vmul.f32 1.0, %v1157
    %v1159 = vtanh.pop %v1141
    %v1160 = vxor.u32 %v1143, 2147483648
    %v1161 = vmul.f32 %v1160, 1.442695
    %v1162 = vpow.pop %v1161
    %v1163 = vadd.f32 %v1162, 1.0
    %v1164 = vrcp.pop %v1163
    %v1165 = vmul.f32 1.0, %v1164
    %v1166 = vmul.f32 %v1158, %v630
    %v1167 = vmul.f32 %v1152, %v1159
    %v1168 = vadd.f32 %v1166, %v1167
    %v1169 = vtanh.pop %v1168
    %v1170 = vmul.f32 %v1165, %v1169
    %s1171 = scalar_lea.vmem %s10, 2
    %1172 = vst [vmem:[%s1171] sm:$0x3] %v1170
    %s1173 = scalar_lea.vmem %s11, 2
    %1174 = vst [vmem:[%s1173] sm:$0x3] %v1168
    %v1175 = vpack.c.bf16 %v1170, %v1170
    %v1176 = vld [vmem:[#allocation8] sm:$0xf]
    %v1177 = vld [vmem:[#allocation8 + $0x4] sm:$0xf]
    %v1178 = vld [vmem:[#allocation8 + $0x8] sm:$0xf]
    %v1179 = vld [vmem:[#allocation8 + $0xc] sm:$0xf]
    %v1180 = vld [vmem:[#allocation8 + $0x10] sm:$0xf]
    %v1181 = vld [vmem:[#allocation8 + $0x14] sm:$0xf]
    %v1182 = vld [vmem:[#allocation8 + $0x18] sm:$0xf]
    %v1183 = vld [vmem:[#allocation8 + $0x1c] sm:$0xf]
    %v1184 = vld [vmem:[#allocation8 + $0x20] sm:$0xf]
    %v1185 = vld [vmem:[#allocation8 + $0x24] sm:$0xf]
    %v1186 = vld [vmem:[#allocation8 + $0x28] sm:$0xf]
    %v1187 = vld [vmem:[#allocation8 + $0x2c] sm:$0xf]
    %v1188 = vld [vmem:[#allocation8 + $0x30] sm:$0xf]
    %v1189 = vld [vmem:[#allocation8 + $0x34] sm:$0xf]
    %v1190 = vld [vmem:[#allocation8 + $0x38] sm:$0xf]
    %v1191 = vld [vmem:[#allocation8 + $0x3c] sm:$0xf]
    %v1192 = vld [vmem:[%s8] sm:$0x1]
    %v1194 = vlaneseq
    %v1195 = vshrl.u32 %v1194, 7
    %v1196 = vsub.s32 0, %v1195
    %v1197 = vrot.slane %v1192, %v1196
    %v1215 = vunpack.c.l.b16 %v1176
    %v1216 = vunpack.c.l.b16 %v1177
    %v1217 = vunpack.c.l.b16 %v1178
    %v1218 = vunpack.c.l.b16 %v1179
    %v1219 = vunpack.c.l.b16 %v1180
    %v1220 = vunpack.c.l.b16 %v1181
    %v1221 = vunpack.c.l.b16 %v1182
    %v1222 = vunpack.c.l.b16 %v1183
    %v1223 = vunpack.c.l.b16 %v1184
    %v1224 = vunpack.c.l.b16 %v1185
    %v1225 = vunpack.c.l.b16 %v1186
    %v1226 = vunpack.c.l.b16 %v1187
    %v1227 = vunpack.c.l.b16 %v1188
    %v1228 = vunpack.c.l.b16 %v1189
    %v1229 = vunpack.c.l.b16 %v1190
    %v1230 = vunpack.c.l.b16 %v1191
    %v1231 = vpack.c.b16 %v1216, %v1215
    %v1232 = vpack.c.b16 %v1218, %v1217
    %v1233 = vpack.c.b16 %v1220, %v1219
    %v1234 = vpack.c.b16 %v1222, %v1221
    %v1235 = vpack.c.b16 %v1224, %v1223
    %v1236 = vpack.c.b16 %v1226, %v1225
    %v1237 = vpack.c.b16 %v1228, %v1227
    %v1238 = vpack.c.b16 %v1230, %v1229
    %1247 = vmatprep.subr.bf16.mxu0 0
    %1248 = vmatpush1.bf16.msra.mxu0 %v1238
    %1249 = vmatprep.subr.bf16.mxu0 0
    %1250 = vmatpush1.bf16.msra.mxu0 %v1237
    %1251 = vmatprep.subr.bf16.mxu0 0
    %1252 = vmatpush1.bf16.msra.mxu0 %v1236
    %1253 = vmatprep.subr.bf16.mxu0 0
    %1254 = vmatpush1.bf16.msra.mxu0 %v1235
    %1255 = vmatprep.subr.bf16.mxu0 0
    %1256 = vmatpush1.bf16.msra.mxu0 %v1234
    %1257 = vmatprep.subr.bf16.mxu0 0
    %1258 = vmatpush1.bf16.msra.mxu0 %v1233
    %1259 = vmatprep.subr.bf16.mxu0 0
    %1260 = vmatpush1.bf16.msra.mxu0 %v1232
    %1261 = vmatprep.subr.bf16.mxu0 0
    %1262 = vmatpush1.bf16.msra.mxu0 %v1231
    %1263 = vmatprep.subr.bf16.mxu0 0
    %1264 = vmatpush2.bf16.msra.mxu0 0
    %1265 = vmatprep.subr.bf16.mxu0 0
    %1266 = vmatpush2.bf16.msra.mxu0 0
    %1267 = vmatprep.subr.bf16.mxu0 0
    %1268 = vmatpush2.bf16.msra.mxu0 0
    %1269 = vmatprep.subr.bf16.mxu0 0
    %1270 = vmatpush2.bf16.msra.mxu0 0
    %1271 = vmatprep.subr.bf16.mxu0 0
    %1272 = vmatpush2.bf16.msra.mxu0 0
    %1273 = vmatprep.subr.bf16.mxu0 0
    %1274 = vmatpush2.bf16.msra.mxu0 0
    %1275 = vmatprep.subr.bf16.mxu0 0
    %1276 = vmatpush2.bf16.msra.mxu0 0
    %1277 = vmatprep.subr.bf16.mxu0 0
    %1278 = vmatpush2.bf16.msra.mxu0 0
    %1279 = vmatprep.mubr.bf16.mxu0 0
    %1280 = vmatmul.mubr.bf16.gmra.mxu0 %v1175
    %v1281 = vpop.f32.mrf.mxu0
    %v1282 = vadd.f32 %v1197, %v1281
    %v1283 = vpop.f32.mrf.mxu0
    %v1284 = vpop.f32.mrf.mxu0
    %v1285 = vpop.f32.mrf.mxu0
    %1286 = vdwg.mxu0
    %1287 = vst [vmem:[#allocation9] sm:$0x3] %v1282
    // Predicated region
    $region50: #{decoder_forward.1} parent=1 // pred_check
      _
    $region51: #{decoder_forward.1} parent=1 // pred_check_branch
      %1289 = sbr.rel (0) target = $region53
    $region52: #{decoder_forward.1} parent=1 // pred_region
      %s1291 = ssub.s32 32, 32
      %1292 = vsyncadd [#allocation5], %s1291
      %s1294 = sshll.u32 [#allocation9], 4
      %s1295 = int_to_ptr.vmem [resolvable:$true] %s1294
      %1297 = dma.vmem_to_hbm [thread:$0]  %s1295, 32, %s9, [#allocation5]
    $region53: #{decoder_forward.1} parent=1 // pred_fallthru
      _
    // Predicated region
    $region54: #{decoder_forward.1} parent=1 // pred_check
      _
    $region55: #{decoder_forward.1} parent=1 // pred_check_branch
      %1299 = sbr.rel (0) target = $region57
    $region56: #{decoder_forward.1} parent=1 // pred_region
      _
    $region57: #{decoder_forward.1} parent=1 // pred_fallthru
      _
    // Predicated region
    $region58: #{decoder_forward.1} parent=1 // pred_check
      _
    $region59: #{decoder_forward.1} parent=1 // pred_check_branch
      %1301 = sbr.rel (0) target = $region61
    $region60: #{decoder_forward.1} parent=1 // pred_region
      _
    $region61: #{decoder_forward.1} parent=1 // pred_fallthru
      _
    // Predicated region
    $region62: #{decoder_forward.1} parent=1 // pred_check
      _
    $region63: #{decoder_forward.1} parent=1 // pred_check_branch
      %1303 = sbr.rel (0) target = $region65
    $region64: #{decoder_forward.1} parent=1 // pred_region
      %1304 = dma.done [#allocation5], 32
    $region65: #{decoder_forward.1} parent=1 // pred_fallthru
      _
    // Predicated region
    $region66: #{decoder_forward.1} parent=1 // pred_check
      _
    $region67: #{decoder_forward.1} parent=1 // pred_check_branch
      %1306 = sbr.rel (0) target = $region69
    $region68: #{decoder_forward.1} parent=1 // pred_region
      _
    $region69: #{decoder_forward.1} parent=1 // pred_fallthru
      _
    // Predicated region
    $region70: #{decoder_forward.1} parent=1 // pred_check
      _
    $region71: #{decoder_forward.1} parent=1 // pred_check_branch
      %1308 = sbr.rel (0) target = $region73
    $region72: #{decoder_forward.1} parent=1 // pred_region
      _
    $region73: #{decoder_forward.1} parent=1 // pred_fallthru
      _
    %1309 = vsyncpa [#allocation4], 1
    %1310 = vsyncpa [#allocation7], 1
    %1311 = vsyncpa [#allocation5], 1

</llo_original>
